<compile_context>
chip_gen: v7x
topology: tpu7x:2x2x1
jax: 0.10.0
libtpu: 0.0.40
codegen_flags: <defaults>
</compile_context>

<pallas_src>
import jax
import jax.numpy as jnp
from jax.experimental import pallas as pl
from jax.experimental.pallas import tpu as pltpu

_NEG_BIG = -1e30  # effectively -inf for padded vocab columns, but finite (no inf-inf NaNs)


def _round_up(x, m):
    return (x + m - 1) // m * m


def _proj_logsoftmax_kernel(x_ref, w_ref, b_ref, o_ref, m_sc, l_sc):
    # Grid: (m_tile, phase, vocab_tile).  phase 0 = online logsumexp, phase 1 = write.
    phase = pl.program_id(1)
    vtile = pl.program_id(2)

    @pl.when((phase == 0) & (vtile == 0))
    def _init():
        m_sc[...] = jnp.full_like(m_sc, -jnp.inf)
        l_sc[...] = jnp.zeros_like(l_sc)

    # (tm, tn) f32 logits tile: bf16 MXU operands, f32 accumulation, f32 bias add.
    logits = jnp.dot(x_ref[...], w_ref[...], preferred_element_type=jnp.float32)
    logits = logits + b_ref[...]

    @pl.when(phase == 0)
    def _accumulate():
        m_prev = m_sc[...]
        m_new = jnp.maximum(m_prev, jnp.max(logits, axis=-1, keepdims=True))
        l_sc[...] = l_sc[...] * jnp.exp(m_prev - m_new) + jnp.sum(
            jnp.exp(logits - m_new), axis=-1, keepdims=True)
        m_sc[...] = m_new

    # Fold (m, l) -> lse = m + log(l) once per row tile so the phase-1 hot path is a
    # single subtract per vocab tile (no per-tile log on the EUP).
    @pl.when((phase == 1) & (vtile == 0))
    def _finalize_lse():
        m_sc[...] = m_sc[...] + jnp.log(l_sc[...])

    @pl.when(phase == 1)
    def _write():
        o_ref[...] = (logits - m_sc[...]).astype(o_ref.dtype)


def projection_layer(x, w_dv, bias, *, tm=256, tn=512,
                     mxu_dtype=jnp.bfloat16, out_dtype=None):
    """log_softmax(x @ w_dv + bias, axis=-1).

    x    : (batch, seq, d_model)
    w_dv : (d_model, vocab)  -- nn.Linear weight (vocab, d_model) transposed once at load time
    bias : (vocab,)
    """
    batch, seq, d_model = x.shape
    d_w, vocab = w_dv.shape
    assert d_w == d_model
    if out_dtype is None:
        out_dtype = x.dtype  # keep log-probs in the activation dtype (f32 recommended)

    M = batch * seq
    # Row tile: big enough to feed the MXU, clamped so tiny inputs aren't padded to 256.
    tm = max(8, min(tm, _round_up(M, 8)))
    Mp = _round_up(M, tm)
    # Vocab tile: multiple of 128 lanes, clamped to the 128-padded vocab.
    tn = min(tn, _round_up(vocab, 128))
    Vp = _round_up(vocab, tn)

    # Operand prep: bf16 MXU feed, f32 bias, pad ragged edges.
    x2d = x.reshape(M, d_model).astype(mxu_dtype)
    if Mp != M:
        x2d = jnp.pad(x2d, ((0, Mp - M), (0, 0)))
    w = w_dv.astype(mxu_dtype)
    b = bias.astype(jnp.float32).reshape(1, vocab)
    if Vp != vocab:
        w = jnp.pad(w, ((0, 0), (0, Vp - vocab)))
        b = jnp.pad(b, ((0, 0), (0, Vp - vocab)), constant_values=_NEG_BIG)

    grid = (Mp // tm, 2, Vp // tn)

    # VMEM budget (double-buffered ins/outs + f32 logits + scratch) with headroom,
    # kept comfortably below v7x's 64 MiB per-core VMEM.
    mxu_bytes = jnp.dtype(mxu_dtype).itemsize
    out_bytes = jnp.dtype(out_dtype).itemsize
    est = (2 * tm * d_model * mxu_bytes      # x tile
           + 2 * d_model * tn * mxu_bytes    # weight slice
           + 2 * tn * 4                      # bias slice
           + 2 * tm * tn * out_bytes         # output tile
           + tm * tn * 4                     # f32 logits intermediate
           + 2 * tm * 4)                     # running max / sum scratch
    vmem_limit = min(max(int(1.5 * est) + (8 << 20), 16 << 20), 48 << 20)

    out = pl.pallas_call(
        _proj_logsoftmax_kernel,
        out_shape=jax.ShapeDtypeStruct((Mp, Vp), out_dtype),
        grid_spec=pltpu.PrefetchScalarGridSpec(
            num_scalar_prefetch=0,
            grid=grid,
            in_specs=[
                # x row tile stays resident across the whole (phase, vocab) inner loop.
                pl.BlockSpec((tm, d_model), lambda m, p, v: (m, 0)),
                # Only the (d_model, tn) weight slice for this vocab tile is resident.
                pl.BlockSpec((d_model, tn), lambda m, p, v: (0, v)),
                pl.BlockSpec((1, tn), lambda m, p, v: (0, v)),
            ],
            # Phase 0 parks on block (m, 0) (never written); phase 1 writes (m, v).
            out_specs=pl.BlockSpec((tm, tn), lambda m, p, v: (m, p * v)),
            scratch_shapes=[
                pltpu.VMEM((tm, 1), jnp.float32),  # running row max (then folded lse)
                pltpu.VMEM((tm, 1), jnp.float32),  # running row sum(exp)
            ],
        ),
        compiler_params=pltpu.CompilerParams(
            dimension_semantics=("parallel", "arbitrary", "arbitrary"),
            vmem_limit_bytes=vmem_limit,
        ),
    )(x2d, w, b)

    return out[:M, :vocab].reshape(batch, seq, vocab)


if __name__ == "__main__":
    # Small shapes consistent with the module: (batch, seq, d_model) -> (batch, seq, vocab)
    batch, seq, d_model, vocab = 2, 8, 32, 1000

    key = jax.random.PRNGKey(0)
    kx, kw, kb = jax.random.split(key, 3)

    # Deterministic params mimicking nn.Linear's U(-1/sqrt(d_model), 1/sqrt(d_model)).
    bound = 1.0 / (d_model ** 0.5)
    weight_torch = jax.random.uniform(kw, (vocab, d_model), jnp.float32, -bound, bound)
    bias = jax.random.uniform(kb, (vocab,), jnp.float32, -bound, bound)
    # Hoisted weight transpose: done ONCE at parameter-load time, not per forward.
    w_dv = jnp.transpose(weight_torch)  # (d_model, vocab), lane-dense

    x = jax.random.normal(kx, (batch, seq, d_model), jnp.float32)

    # Default tiles (tm clamped for the tiny M; vocab padded to a multiple of tn).
    out = jax.block_until_ready(projection_layer(x, w_dv, bias))

    # Small explicit tiles to exercise multi-tile vocab (online LSE) + row padding paths.
    out_small = jax.block_until_ready(projection_layer(x, w_dv, bias, tm=8, tn=256))

    # Reference with matching bf16 MXU operands (f32 accumulation), log-softmax in f32.
    logits_ref = jnp.einsum(
        "bsd,dv->bsv",
        x.astype(jnp.bfloat16), w_dv.astype(jnp.bfloat16),
        preferred_element_type=jnp.float32,
    ) + bias
    ref = jax.nn.log_softmax(logits_ref, axis=-1)

    assert out.shape == (batch, seq, vocab)
    err = float(jnp.max(jnp.abs(out - ref)))
    assert err < 1e-3, f"default-tile kernel mismatch vs bf16-matched reference: {err}"
    err_small = float(jnp.max(jnp.abs(out_small - ref)))
    assert err_small < 1e-3, f"small-tile kernel mismatch vs bf16-matched reference: {err_small}"

    # Loose sanity check against the exact-f32 reference (bf16 MXU feed introduces small error).
    ref_f32 = jax.nn.log_softmax(jnp.einsum("bsd,dv->bsv", x, w_dv) + bias, axis=-1)
    assert jnp.allclose(out, ref_f32, atol=1e-1, rtol=5e-2)

    print("KERNEL_OK")
</pallas_src>

<mosaic_0001>
module attributes {stable_mosaic.version = 11 : i64} {
  func.func @_proj_logsoftmax_kernel(%arg0: i32, %arg1: i32, %arg2: i32, %arg3: memref<16x32xbf16, #tpu.memory_space<vmem>>, %arg4: memref<32x512xbf16, #tpu.memory_space<vmem>>, %arg5: memref<1x512xf32, #tpu.memory_space<vmem>>, %arg6: memref<16x512xf32, #tpu.memory_space<vmem>>, %arg7: memref<16x1xf32, #tpu.memory_space<vmem>>, %arg8: memref<16x1xf32, #tpu.memory_space<vmem>>) attributes {dimension_semantics = [#tpu.dimension_semantics<parallel>, #tpu.dimension_semantics<arbitrary>, #tpu.dimension_semantics<arbitrary>], iteration_bounds = array<i64: 1, 2, 2>, scalar_prefetch = 0 : i64, scratch_operands = 2 : i64, tpu.core_type = #tpu.core_type<tc>, window_params = [{transform_indices = @transform_0, window_bounds = array<i64: 16, 32>}, {transform_indices = @transform_1, window_bounds = array<i64: 32, 512>}, {transform_indices = @transform_2, window_bounds = array<i64: 1, 512>}, {transform_indices = @transform_3, window_bounds = array<i64: 16, 512>}]} {
    %c0_i32 = arith.constant 0 : i32
    %0 = arith.cmpi eq, %arg1, %c0_i32 : i32
    %c0_i32_0 = arith.constant 0 : i32
    %1 = arith.cmpi eq, %arg2, %c0_i32_0 : i32
    %2 = arith.andi %0, %1 : i1
    %3 = arith.extui %2 : i1 to i32
    %c0_i32_1 = arith.constant 0 : i32
    %4 = arith.cmpi ne, %3, %c0_i32_1 : i32
    scf.if %4 {
      %cst_13 = arith.constant 0xFF800000 : f32
      %22 = vector.broadcast %cst_13 : f32 to vector<16x1xf32>
      %c0_14 = arith.constant 0 : index
      %c0_15 = arith.constant 0 : index
      %23 = vector.load %arg7[%c0_14, %c0_15] : memref<16x1xf32, #tpu.memory_space<vmem>>, vector<16x1xf32>
      tpu.vector_store %arg7[%c0_14, %c0_15], %22 {strides = array<i32>} : memref<16x1xf32, #tpu.memory_space<vmem>>, vector<16x1xf32>,
      %cst_16 = arith.constant 0.000000e+00 : f32
      %24 = vector.broadcast %cst_16 : f32 to vector<16x1xf32>
      %c0_17 = arith.constant 0 : index
      %c0_18 = arith.constant 0 : index
      %25 = vector.load %arg8[%c0_17, %c0_18] : memref<16x1xf32, #tpu.memory_space<vmem>>, vector<16x1xf32>
      tpu.vector_store %arg8[%c0_17, %c0_18], %24 {strides = array<i32>} : memref<16x1xf32, #tpu.memory_space<vmem>>, vector<16x1xf32>,
    } else {
    }
    %c0 = arith.constant 0 : index
    %c0_2 = arith.constant 0 : index
    %5 = vector.load %arg3[%c0, %c0_2] : memref<16x32xbf16, #tpu.memory_space<vmem>>, vector<16x32xbf16>
    %c0_3 = arith.constant 0 : index
    %c0_4 = arith.constant 0 : index
    %6 = vector.load %arg4[%c0_3, %c0_4] : memref<32x512xbf16, #tpu.memory_space<vmem>>, vector<32x512xbf16>
    %cst = arith.constant dense<0.000000e+00> : vector<16x512xf32>
    %7 = tpu.matmul %5, %6, %cst {dimension_numbers = #tpu.dot_dimension_numbers<[1], [0], [0], [1], [0, 0, 1, 1], [], []>} : vector<16x32xbf16>, vector<32x512xbf16>, vector<16x512xf32> -> vector<16x512xf32>
    %c0_5 = arith.constant 0 : index
    %c0_6 = arith.constant 0 : index
    %8 = vector.load %arg5[%c0_5, %c0_6] : memref<1x512xf32, #tpu.memory_space<vmem>>, vector<1x512xf32>
    %9 = vector.broadcast %8 : vector<1x512xf32> to vector<16x512xf32>
    %10 = arith.addf %7, %9 : vector<16x512xf32>
    %c0_i32_7 = arith.constant 0 : i32
    %11 = arith.cmpi eq, %arg1, %c0_i32_7 : i32
    %12 = arith.extui %11 : i1 to i32
    %c0_i32_8 = arith.constant 0 : i32
    %13 = arith.cmpi ne, %12, %c0_i32_8 : i32
    scf.if %13 {
      %c0_13 = arith.constant 0 : index
      %c0_14 = arith.constant 0 : index
      %22 = vector.load %arg7[%c0_13, %c0_14] : memref<16x1xf32, #tpu.memory_space<vmem>>, vector<16x1xf32>
      %cst_15 = arith.constant dense<0xFF800000> : vector<16xf32>
      %23 = vector.multi_reduction <maximumf>, %10, %cst_15 [1] : vector<16x512xf32> to vector<16xf32>
      %24 = vector.shape_cast %23 : vector<16xf32> to vector<16x1xf32>
      %25 = arith.maximumf %22, %24 : vector<16x1xf32>
      %c0_16 = arith.constant 0 : index
      %c0_17 = arith.constant 0 : index
      %26 = vector.load %arg8[%c0_16, %c0_17] : memref<16x1xf32, #tpu.memory_space<vmem>>, vector<16x1xf32>
      %27 = arith.subf %22, %25 : vector<16x1xf32>
      %28 = math.exp %27 : vector<16x1xf32>
      %29 = arith.mulf %26, %28 : vector<16x1xf32>
      %30 = vector.broadcast %25 : vector<16x1xf32> to vector<16x512xf32>
      %31 = arith.subf %10, %30 : vector<16x512xf32>
      %32 = math.exp %31 : vector<16x512xf32>
      %cst_18 = arith.constant dense<0.000000e+00> : vector<16xf32>
      %33 = vector.multi_reduction <add>, %32, %cst_18 [1] : vector<16x512xf32> to vector<16xf32>
      %34 = vector.shape_cast %33 : vector<16xf32> to vector<16x1xf32>
      %35 = arith.addf %29, %34 : vector<16x1xf32>
      %c0_19 = arith.constant 0 : index
      %c0_20 = arith.constant 0 : index
      %36 = vector.load %arg8[%c0_19, %c0_20] : memref<16x1xf32, #tpu.memory_space<vmem>>, vector<16x1xf32>
      tpu.vector_store %arg8[%c0_19, %c0_20], %35 {strides = array<i32>} : memref<16x1xf32, #tpu.memory_space<vmem>>, vector<16x1xf32>,
      %c0_21 = arith.constant 0 : index
      %c0_22 = arith.constant 0 : index
      %37 = vector.load %arg7[%c0_21, %c0_22] : memref<16x1xf32, #tpu.memory_space<vmem>>, vector<16x1xf32>
      tpu.vector_store %arg7[%c0_21, %c0_22], %25 {strides = array<i32>} : memref<16x1xf32, #tpu.memory_space<vmem>>, vector<16x1xf32>,
    } else {
    }
    %c1_i32 = arith.constant 1 : i32
    %14 = arith.cmpi eq, %arg1, %c1_i32 : i32
    %c0_i32_9 = arith.constant 0 : i32
    %15 = arith.cmpi eq, %arg2, %c0_i32_9 : i32
    %16 = arith.andi %14, %15 : i1
    %17 = arith.extui %16 : i1 to i32
    %c0_i32_10 = arith.constant 0 : i32
    %18 = arith.cmpi ne, %17, %c0_i32_10 : i32
    scf.if %18 {
      %c0_13 = arith.constant 0 : index
      %c0_14 = arith.constant 0 : index
      %22 = vector.load %arg7[%c0_13, %c0_14] : memref<16x1xf32, #tpu.memory_space<vmem>>, vector<16x1xf32>
      %c0_15 = arith.constant 0 : index
      %c0_16 = arith.constant 0 : index
      %23 = vector.load %arg8[%c0_15, %c0_16] : memref<16x1xf32, #tpu.memory_space<vmem>>, vector<16x1xf32>
      %24 = math.log %23 : vector<16x1xf32>
      %25 = arith.addf %22, %24 : vector<16x1xf32>
      %c0_17 = arith.constant 0 : index
      %c0_18 = arith.constant 0 : index
      %26 = vector.load %arg7[%c0_17, %c0_18] : memref<16x1xf32, #tpu.memory_space<vmem>>, vector<16x1xf32>
      tpu.vector_store %arg7[%c0_17, %c0_18], %25 {strides = array<i32>} : memref<16x1xf32, #tpu.memory_space<vmem>>, vector<16x1xf32>,
    } else {
    }
    %c1_i32_11 = arith.constant 1 : i32
    %19 = arith.cmpi eq, %arg1, %c1_i32_11 : i32
    %20 = arith.extui %19 : i1 to i32
    %c0_i32_12 = arith.constant 0 : i32
    %21 = arith.cmpi ne, %20, %c0_i32_12 : i32
    scf.if %21 {
      %c0_13 = arith.constant 0 : index
      %c0_14 = arith.constant 0 : index
      %22 = vector.load %arg7[%c0_13, %c0_14] : memref<16x1xf32, #tpu.memory_space<vmem>>, vector<16x1xf32>
      %23 = vector.broadcast %22 : vector<16x1xf32> to vector<16x512xf32>
      %24 = arith.subf %10, %23 : vector<16x512xf32>
      %c0_15 = arith.constant 0 : index
      %c0_16 = arith.constant 0 : index
      %25 = vector.load %arg6[%c0_15, %c0_16] : memref<16x512xf32, #tpu.memory_space<vmem>>, vector<16x512xf32>
      tpu.vector_store %arg6[%c0_15, %c0_16], %24 {strides = array<i32>} : memref<16x512xf32, #tpu.memory_space<vmem>>, vector<16x512xf32>,
    } else {
    }
    return
  }
  func.func @transform_0(%arg0: i32, %arg1: i32, %arg2: i32) -> (i32, i32) {
    %c0_i32 = arith.constant 0 : i32
    %c0_i32_0 = arith.constant 0 : i32
    return %arg0, %c0_i32 : i32, i32
  }
  func.func @transform_1(%arg0: i32, %arg1: i32, %arg2: i32) -> (i32, i32) {
    %c0_i32 = arith.constant 0 : i32
    %c0_i32_0 = arith.constant 0 : i32
    return %c0_i32, %arg2 : i32, i32
  }
  func.func @transform_2(%arg0: i32, %arg1: i32, %arg2: i32) -> (i32, i32) {
    %c0_i32 = arith.constant 0 : i32
    %c0_i32_0 = arith.constant 0 : i32
    return %c0_i32, %arg2 : i32, i32
  }
  func.func @transform_3(%arg0: i32, %arg1: i32, %arg2: i32) -> (i32, i32) {
    %0 = arith.muli %arg1, %arg2 : i32
    %c0_i32 = arith.constant 0 : i32
    return %arg0, %0 : i32, i32
  }
}

</mosaic_0001>

<llo_original>
// kernel: tpu_custom_call.1
$region0: #{tpu_custom_call.1}
  #allocation0 [shape = 'u32[]', space=smem, size = 0x4, offset = 0x4, fixed_abs, tag = 'smem constant byte address 0x4 - core index']
  #allocation1 [shape = 'u32[144,128]{1,0:T(1,128)}', space=vmem, size = 0x12000, scoped, tag = 'internal scratch']
  #allocation2 [shape = 'f32[16,1]{1,0:T(8,128)}', space=vmem, size = 0x2000, scoped, tag = 'scratch operand']
  #allocation3 [shape = 'f32[16,1]{1,0:T(8,128)}', space=vmem, size = 0x2000, scoped, tag = 'scratch operand']
  %s0 = inlined_call_operand.hbm [shape: bf16[16,32], index: 0, kind: input, shape index: {}]
  %s1 = inlined_call_operand.hbm [shape: bf16[32,1024], index: 1, kind: input, shape index: {}]
  %s2 = inlined_call_operand.hbm [shape: f32[1,1024], index: 2, kind: input, shape index: {}]
  %s3 = inlined_call_operand.hbm [shape: f32[16,1024], index: 3, kind: output, shape index: {}]
  %s4 = sld [smem:[#allocation0]]
  $region73: #{tpu_custom_call.1} parent=0
    _
  %s6 = ssub.s32 1, %s4
  %s7 = scalar_select 0, %s6, %s4
  $region1: #{tpu_custom_call.1} parent=0
    #allocation4 [shape = 'u8[4096]{0}', space=vmem, size = 0x1000, scoped, tag = 'input window, operand 0, single buffered']
    #allocation5 [shape = 's32[2]{0}', space=sflag, size = 0x8, scoped, tag = 'scoped memory for tpu_custom_call.1']
    #allocation6 [shape = 's32[2]{0}', space=sflag, size = 0x8, scoped, tag = 'scoped memory for tpu_custom_call.1']
    #allocation7 [shape = 'u8[65536]{0}', space=vmem, size = 0x10000, scoped, tag = 'input window, operand 1']
    #allocation8 [shape = 's32[2]{0}', space=sflag, size = 0x8, scoped, tag = 'scoped memory for tpu_custom_call.1']
    #allocation9 [shape = 'u8[4096]{0}', space=vmem, size = 0x1000, scoped, tag = 'input window, operand 2']
    #allocation10 [shape = 'u8[65536]{0}', space=vmem, size = 0x10000, scoped, tag = 'output window, operand 0']
    %8 = vsyncpa [#allocation5], 0
    %9 = vsyncpa [#allocation8], 0
    %s10 = scalar_lea.sflag [#allocation8], 1
    %11 = vsyncpa %s10, 0
    %12 = vsyncpa [#allocation6], 0
    %s13 = scalar_lea.sflag [#allocation6], 1
    %14 = vsyncpa %s13, 0
    loop: start=0, step=1, limit=6
    $region2: #{tpu_custom_call.1} parent=1 // loop_pre_header
      _
    $region3: #{tpu_custom_call.1} parent=1 // loop_header
      %s16 = sphi 0, %s20
      %p17 = scmp.ge.s32.totalorder %s16, 6
      %s23 = sphi 0, %s42
      %s24 = sphi 0, %s38
      %s25 = sphi 0, %s34
      %s26 = sphi 0, %s23
      %s27 = sphi 0, %s24
      %s28 = sphi 0, %s25
      %s29 = sphi 0, %s26
      %s30 = sphi 0, %s27
      %s31 = sphi 0, %s28
      %s45 = sphi 0, %s47
      %s48 = sphi 0, %s45
      %s49 = sphi 0, %s48
      %s65 = sphi 0, %s49
      %s71 = sphi 0, %s73
      %s74 = sphi 0, %s71
      %s75 = sphi 0, %s74
      %s91 = sphi 0, %s75
      %s97 = sphi 0, %s99
      %s100 = sphi 0, %s97
      %s101 = sphi 0, %s100
      %s117 = sphi 0, %s101
      %s127 = sphi 0, %s129
      %s130 = sphi 0, %s127
      %s131 = sphi 0, %s130
      %s147 = sphi 0, %s131
    $region4: #{tpu_custom_call.1} parent=1 // loop_header_branch
      %19 = sbr.rel (%p17) target = $region8
    $region5: #{tpu_custom_call.1} parent=1 // loop_body
      %s21 = ssub.s32 %s16, 1
      %s22 = ssub.s32 %s16, 2
      %s32 = sadd.s32 1, %s25
      %p33 = scmp.ge.s32.totalorder %s32, 2
      %s34 = scalar_select %p33, 0, %s32
      %s35 = sadd.s32 1, %s24
      %s36 = scalar_select %p33, %s35, %s24
      %p37 = scmp.ge.s32.totalorder %s36, 2
      %s38 = scalar_select %p37, 0, %s36
      %s39 = sadd.s32 1, %s23
      %s40 = scalar_select %p37, %s39, %s23
      %p41 = scmp.ge.s32.totalorder %s40, 1
      %s42 = scalar_select %p41, 0, %s40
      %s43 = ssub.s32 %s23, %s42
      %p44 = scmp.eq.s32.totalorder %s43, 0
      %s46 = sadd.s32 %s45, 1
      %s47 = scalar_select %p44, %s45, %s46
      %p50 = pneg %p44
      %p51 = scmp.eq.s32.totalorder %s16, 3
      %p52 = por %p50, %p51
      %p53 = scmp.ne.s32.totalorder %s45, %s48
      %p54 = scmp.eq.s32.totalorder %s16, 0
      %p55 = por %p53, %p54
      %p56 = scmp.ne.s32.totalorder %s45, %s48
      %p57 = scmp.eq.s32.totalorder %s21, 3
      %p58 = por %p56, %p57
      %p59 = scmp.ne.s32.totalorder %s48, %s49
      %p60 = scmp.eq.s32.totalorder %s21, 0
      %p61 = por %p59, %p60
      %p62 = scmp.ne.s32.totalorder %s48, %s49
      %p63 = scmp.eq.s32.totalorder %s22, 3
      %p64 = por %p62, %p63
      %p66 = scmp.ne.s32.totalorder %s49, %s65
      %p67 = scmp.eq.s32.totalorder %s22, 0
      %p68 = por %p66, %p67
      %s69 = ssub.s32 %s25, %s34
      %p70 = scmp.eq.s32.totalorder %s69, 0
      %s72 = sadd.s32 %s71, 1
      %s73 = scalar_select %p70, %s71, %s72
      %p76 = pneg %p70
      %p77 = scmp.eq.s32.totalorder %s16, 3
      %p78 = por %p76, %p77
      %p79 = scmp.ne.s32.totalorder %s71, %s74
      %p80 = scmp.eq.s32.totalorder %s16, 0
      %p81 = por %p79, %p80
      %p82 = scmp.ne.s32.totalorder %s71, %s74
      %p83 = scmp.eq.s32.totalorder %s21, 3
      %p84 = por %p82, %p83
      %p85 = scmp.ne.s32.totalorder %s74, %s75
      %p86 = scmp.eq.s32.totalorder %s21, 0
      %p87 = por %p85, %p86
      %p88 = scmp.ne.s32.totalorder %s74, %s75
      %p89 = scmp.eq.s32.totalorder %s22, 3
      %p90 = por %p88, %p89
      %p92 = scmp.ne.s32.totalorder %s75, %s91
      %p93 = scmp.eq.s32.totalorder %s22, 0
      %p94 = por %p92, %p93
      %s95 = ssub.s32 %s25, %s34
      %p96 = scmp.eq.s32.totalorder %s95, 0
      %s98 = sadd.s32 %s97, 1
      %s99 = scalar_select %p96, %s97, %s98
      %p102 = pneg %p96
      %p103 = scmp.eq.s32.totalorder %s16, 3
      %p104 = por %p102, %p103
      %p105 = scmp.ne.s32.totalorder %s97, %s100
      %p106 = scmp.eq.s32.totalorder %s16, 0
      %p107 = por %p105, %p106
      %p108 = scmp.ne.s32.totalorder %s97, %s100
      %p109 = scmp.eq.s32.totalorder %s21, 3
      %p110 = por %p108, %p109
      %p111 = scmp.ne.s32.totalorder %s100, %s101
      %p112 = scmp.eq.s32.totalorder %s21, 0
      %p113 = por %p111, %p112
      %p114 = scmp.ne.s32.totalorder %s100, %s101
      %p115 = scmp.eq.s32.totalorder %s22, 3
      %p116 = por %p114, %p115
      %p118 = scmp.ne.s32.totalorder %s101, %s117
      %p119 = scmp.eq.s32.totalorder %s22, 0
      %p120 = por %p118, %p119
      %s121 = smul.u32 %s24, %s25
      %s122 = smul.u32 %s38, %s34
      %s123 = ssub.s32 %s23, %s42
      %s124 = ssub.s32 %s121, %s122
      %s125 = sor.u32 %s123, %s124
      %p126 = scmp.eq.s32.totalorder %s125, 0
      %s128 = sadd.s32 %s127, 1
      %s129 = scalar_select %p126, %s127, %s128
      %p132 = pneg %p126
      %p133 = scmp.eq.s32.totalorder %s16, 3
      %p134 = por %p132, %p133
      %p135 = scmp.ne.s32.totalorder %s127, %s130
      %p136 = scmp.eq.s32.totalorder %s16, 0
      %p137 = por %p135, %p136
      %p138 = scmp.ne.s32.totalorder %s127, %s130
      %p139 = scmp.eq.s32.totalorder %s21, 3
      %p140 = por %p138, %p139
      %p141 = scmp.ne.s32.totalorder %s130, %s131
      %p142 = scmp.eq.s32.totalorder %s21, 0
      %p143 = por %p141, %p142
      %p144 = scmp.ne.s32.totalorder %s130, %s131
      %p145 = scmp.eq.s32.totalorder %s22, 3
      %p146 = por %p144, %p145
      %p148 = scmp.ne.s32.totalorder %s131, %s147
      %p149 = scmp.eq.s32.totalorder %s22, 0
      %p150 = por %p148, %p149
      %p151 = scmp.le.s32.totalorder 1, %s16
      %p152 = scmp.lt.s32.totalorder %s16, 5
      %p153 = pnand %p151, %p152
      %p154 = pneg %p153
      // Predicated region
      $region9: #{tpu_custom_call.1} parent=5 // pred_check
        _
      $region10: #{tpu_custom_call.1} parent=5 // pred_check_branch
        %156 = sbr.rel (%p153) target = $region12
      $region11: #{tpu_custom_call.1} parent=5 // pred_region
        %s157 = ssub.s32 %s16, 1
        // Predicated region
        $region13: #{tpu_custom_call.1} parent=11 // pred_check
          %p158 = pneg %p61
        $region14: #{tpu_custom_call.1} parent=11 // pred_check_branch
          %160 = sbr.rel (%p158) target = $region16
        $region15: #{tpu_custom_call.1} parent=11 // pred_region
          %s161 = smul.u32 2, %s26
          %s163 = ssub.s32 128, 128
          %164 = vsyncadd [#allocation5], %s163
          %s165 = smul.addr %s161, 64
          %s166 = scalar_lea.hbm %s0, %s165
          %s167 = sshll.u32 [#allocation4], 4
          %s168 = int_to_ptr.vmem [resolvable:$true] %s167
          %173 = dma.hbm_to_vmem [thread:$0]  %s166, 128, %s168, [#allocation5], 64, 64, 4
        $region16: #{tpu_custom_call.1} parent=11 // pred_fallthru
          _
      $region12: #{tpu_custom_call.1} parent=5 // pred_fallthru
        _
      %p174 = scmp.lt.s32.totalorder %s16, 4
      // Predicated region
      $region17: #{tpu_custom_call.1} parent=5 // pred_check
        %p175 = pneg %p174
      $region18: #{tpu_custom_call.1} parent=5 // pred_check_branch
        %177 = sbr.rel (%p175) target = $region20
      $region19: #{tpu_custom_call.1} parent=5 // pred_region
        // Predicated region
        $region21: #{tpu_custom_call.1} parent=19 // pred_check
          %p178 = pneg %p81
        $region22: #{tpu_custom_call.1} parent=19 // pred_check_branch
          %180 = sbr.rel (%p178) target = $region24
        $region23: #{tpu_custom_call.1} parent=19 // pred_region
          %s181 = sand.u32 %s16, 1
          %s182 = scalar_lea.sflag [#allocation8], %s181
          %s183 = sand.u32 %s71, 1
          %s184 = smul.addr %s183, 64
          %s185 = scalar_lea.vmem [#allocation7], %s184
          %s186 = smul.u32 4, %s25
          %s188 = ssub.s32 1024, 1024
          %189 = vsyncadd %s182, %s188
          %s190 = smul.addr %s186, 64
          %s191 = scalar_lea.hbm %s1, %s190
          %s192 = sshll.u32 %s185, 4
          %s193 = int_to_ptr.vmem [resolvable:$true] %s192
          %198 = dma.hbm_to_vmem [thread:$0]  %s191, 1024, %s193, %s182, 512, 256, 16
        $region24: #{tpu_custom_call.1} parent=19 // pred_fallthru
          _
        // Predicated region
        $region25: #{tpu_custom_call.1} parent=19 // pred_check
          %p199 = pneg %p107
        $region26: #{tpu_custom_call.1} parent=19 // pred_check_branch
          %201 = sbr.rel (%p199) target = $region28
        $region27: #{tpu_custom_call.1} parent=19 // pred_region
          %s202 = sand.u32 %s16, 1
          %s203 = scalar_lea.sflag [#allocation8], %s202
          %s204 = sand.u32 %s97, 1
          %s205 = smul.addr %s204, 4
          %s206 = scalar_lea.vmem [#allocation9], %s205
          %s207 = smul.u32 4, %s25
          %s209 = ssub.s32 64, 64
          %210 = vsyncadd %s203, %s209
          %s211 = smul.addr %s207, 16
          %s212 = scalar_lea.hbm %s2, %s211
          %s214 = sshll.u32 %s206, 4
          %s215 = int_to_ptr.vmem [resolvable:$true] %s214
          %217 = dma.hbm_to_vmem [thread:$0]  %s212, 64, %s215, %s203
        $region28: #{tpu_custom_call.1} parent=19 // pred_fallthru
          _
      $region20: #{tpu_custom_call.1} parent=5 // pred_fallthru
        _
      %p218 = scmp.le.s32.totalorder 1, %s16
      %p219 = scmp.lt.s32.totalorder %s16, 5
      %p220 = pnand %p218, %p219
      %p221 = pneg %p220
      // Predicated region
      $region29: #{tpu_custom_call.1} parent=5 // pred_check
        _
      $region30: #{tpu_custom_call.1} parent=5 // pred_check_branch
        %223 = sbr.rel (%p220) target = $region32
      $region31: #{tpu_custom_call.1} parent=5 // pred_region
        %s224 = ssub.s32 %s16, 1
        // Predicated region
        $region33: #{tpu_custom_call.1} parent=31 // pred_check
          %p225 = pneg %p61
        $region34: #{tpu_custom_call.1} parent=31 // pred_check_branch
          %227 = sbr.rel (%p225) target = $region36
        $region35: #{tpu_custom_call.1} parent=31 // pred_region
          %228 = dma.done [#allocation5], 128
        $region36: #{tpu_custom_call.1} parent=31 // pred_fallthru
          _
        %s229 = sand.u32 %s21, 1
        %s230 = scalar_lea.sflag [#allocation8], %s229
        %s231 = sand.u32 %s74, 1
        %s232 = smul.addr %s231, 64
        %s233 = scalar_lea.vmem [#allocation7], %s232
        // Predicated region
        $region37: #{tpu_custom_call.1} parent=31 // pred_check
          %p234 = pneg %p87
        $region38: #{tpu_custom_call.1} parent=31 // pred_check_branch
          %236 = sbr.rel (%p234) target = $region40
        $region39: #{tpu_custom_call.1} parent=31 // pred_region
          %237 = dma.done %s230, 1024
        $region40: #{tpu_custom_call.1} parent=31 // pred_fallthru
          _
        %s238 = sand.u32 %s21, 1
        %s239 = scalar_lea.sflag [#allocation8], %s238
        %s240 = sand.u32 %s100, 1
        %s241 = smul.addr %s240, 4
        %s242 = scalar_lea.vmem [#allocation9], %s241
        // Predicated region
        $region41: #{tpu_custom_call.1} parent=31 // pred_check
          %p243 = pneg %p113
        $region42: #{tpu_custom_call.1} parent=31 // pred_check_branch
          %245 = sbr.rel (%p243) target = $region44
        $region43: #{tpu_custom_call.1} parent=31 // pred_region
          %246 = dma.done %s239, 64
        $region44: #{tpu_custom_call.1} parent=31 // pred_fallthru
          _
        %p247 = pneg %p61
        %p248 = pneg %p58
        %s249 = sand.u32 %s21, 1
        %s250 = scalar_lea.sflag [#allocation8], %s249
        %s251 = sand.u32 %s74, 1
        %s252 = smul.addr %s251, 64
        %s253 = scalar_lea.vmem [#allocation7], %s252
        %p254 = pneg %p87
        %p255 = pneg %p84
        %s256 = sand.u32 %s21, 1
        %s257 = scalar_lea.sflag [#allocation8], %s256
        %s258 = sand.u32 %s100, 1
        %s259 = smul.addr %s258, 4
        %s260 = scalar_lea.vmem [#allocation9], %s259
        %p261 = pneg %p113
        %p262 = pneg %p110
        %p263 = pneg %p143
        %p264 = pneg %p140
        %s265 = sand.u32 %s130, 1
        %s266 = scalar_lea.sflag [#allocation6], %s265
        %s267 = sand.u32 %s130, 1
        %s268 = smul.addr %s267, 64
        %s269 = scalar_lea.vmem [#allocation10], %s268
        %s270 = smul.u32 2, %s26
        %s271 = smul.u32 4, %s28
        %s272 = smul.u32 4, %s28
        %s273 = smul.u32 %s27, %s28
        %s274 = smul.u32 2, %s26
        %s275 = smul.u32 4, %s273
        %p277 = scmp.eq.s32.totalorder %s27, 0
        %p278 = scmp.eq.s32.totalorder %s28, 0
        %p279 = pnand %p277, %p278
        %p280 = pneg %p279
        // Predicated region
        $region45: #{tpu_custom_call.1} parent=31 // pred_check
          _
        $region46: #{tpu_custom_call.1} parent=31 // pred_check_branch
          %282 = sbr.rel (%p279) target = $region48
        $region47: #{tpu_custom_call.1} parent=31 // pred_region
          %vm283 = vcmask 7168
          %284 = vst.msk [vmem:[#allocation2] sm:$0xff] %vm283, -inf
          %285 = vst.msk [vmem:[#allocation2 + $0x8] sm:$0xff] %vm283, -inf
          %286 = vst.msk [vmem:[#allocation3] sm:$0xff] %vm283, 0.0
          %287 = vst.msk [vmem:[#allocation3 + $0x8] sm:$0xff] %vm283, 0.0
        $region48: #{tpu_custom_call.1} parent=31 // pred_fallthru
          _
        %v288 = vld [vmem:[#allocation4] sm:$0xf]
        %v289 = vld [vmem:[#allocation4 + $0x4] sm:$0xf]
        %v290 = vld [vmem:[%s233] sm:$0xff]
        %v291 = vld [vmem:[%s233 + $0x8] sm:$0xff]
        %v292 = vld [vmem:[%s233 + $0x10] sm:$0xff]
        %v293 = vld [vmem:[%s233 + $0x18] sm:$0xff]
        %v294 = vld [vmem:[%s233 + $0x20] sm:$0xff]
        %v295 = vld [vmem:[%s233 + $0x28] sm:$0xff]
        %v296 = vld [vmem:[%s233 + $0x30] sm:$0xff]
        %v297 = vld [vmem:[%s233 + $0x38] sm:$0xff]
        %v298 = vld [vmem:[%s242] sm:$0xf]
        %v300 = vlaneseq
        %v301 = vshrl.u32 %v300, 7
        %v302 = vsub.s32 0, %v301
        %v303 = vrot.slane %v298, %v302
        %v304 = vlaneseq
        %v305 = vshrl.u32 %v304, 7
        %v306 = vsub.s32 1, %v305
        %v307 = vrot.slane %v298, %v306
        %v308 = vlaneseq
        %v309 = vshrl.u32 %v308, 7
        %v310 = vsub.s32 2, %v309
        %v311 = vrot.slane %v298, %v310
        %v312 = vlaneseq
        %v313 = vshrl.u32 %v312, 7
        %v314 = vsub.s32 3, %v313
        %v315 = vrot.slane %v298, %v314
        %v322 = vunpack.c.l.b16 %v288
        %v323 = vunpack.c.l.b16 %v289
        %v324 = vpack.c.b16 %v323, %v322
        %v333 = vunpack.c.l.b16 %v290
        %v334 = vunpack.c.h.b16 %v290
        %v335 = vunpack.c.l.b16 %v291
        %v336 = vunpack.c.h.b16 %v291
        %v337 = vunpack.c.l.b16 %v292
        %v338 = vunpack.c.h.b16 %v292
        %v339 = vunpack.c.l.b16 %v293
        %v340 = vunpack.c.h.b16 %v293
        %v341 = vunpack.c.l.b16 %v294
        %v342 = vunpack.c.h.b16 %v294
        %v343 = vunpack.c.l.b16 %v295
        %v344 = vunpack.c.h.b16 %v295
        %v345 = vunpack.c.l.b16 %v296
        %v346 = vunpack.c.h.b16 %v296
        %v347 = vunpack.c.l.b16 %v297
        %v348 = vunpack.c.h.b16 %v297
        %v349 = vpack.c.b16 %v337, %v333
        %v350 = vpack.c.b16 %v338, %v334
        %v351 = vpack.c.b16 %v339, %v335
        %v352 = vpack.c.b16 %v340, %v336
        %v353 = vpack.c.b16 %v345, %v341
        %v354 = vpack.c.b16 %v346, %v342
        %v355 = vpack.c.b16 %v347, %v343
        %v356 = vpack.c.b16 %v348, %v344
        %vm365 = vcmask 261120
        %v367 = vsel %vm365, %v324, 0
        %369 = vmatprep.subr.bf16.mxu0 %v350
        %370 = vmatpush1.bf16.msra.mxu0 %v349
        %371 = vmatprep.subr.bf16.mxu0 %v354
        %372 = vmatpush1.bf16.msra.mxu0 %v353
        %373 = vmatprep.subr.bf16.mxu0 0
        %374 = vmatpush1.bf16.msra.mxu0 0
        %375 = vmatprep.subr.bf16.mxu0 0
        %376 = vmatpush1.bf16.msra.mxu0 0
        %377 = vmatprep.subr.bf16.mxu0 0
        %378 = vmatpush1.bf16.msra.mxu0 0
        %379 = vmatprep.subr.bf16.mxu0 0
        %380 = vmatpush1.bf16.msra.mxu0 0
        %381 = vmatprep.subr.bf16.mxu0 0
        %382 = vmatpush1.bf16.msra.mxu0 0
        %383 = vmatprep.subr.bf16.mxu0 0
        %384 = vmatpush1.bf16.msra.mxu0 0
        %385 = vmatprep.subr.bf16.mxu0 0
        %386 = vmatpush1.bf16.msra.mxu0 0
        %387 = vmatprep.subr.bf16.mxu0 0
        %388 = vmatpush1.bf16.msra.mxu0 0
        %389 = vmatprep.subr.bf16.mxu0 0
        %390 = vmatpush1.bf16.msra.mxu0 0
        %391 = vmatprep.subr.bf16.mxu0 0
        %392 = vmatpush1.bf16.msra.mxu0 0
        %393 = vmatprep.subr.bf16.mxu0 0
        %394 = vmatpush1.bf16.msra.mxu0 0
        %395 = vmatprep.subr.bf16.mxu0 0
        %396 = vmatpush1.bf16.msra.mxu0 0
        %397 = vmatprep.subr.bf16.mxu0 0
        %398 = vmatpush1.bf16.msra.mxu0 0
        %399 = vmatprep.subr.bf16.mxu0 0
        %400 = vmatpush1.bf16.msra.mxu0 0
        %401 = vmatprep.mubr.bf16.mxu0 0
        %402 = vmatmul.mubr.bf16.gmra.mrb[0].mxu0 %v367
        %v403 = vpop.f32.mrb[0].mxu0
        %v404 = vadd.f32 %v303, %v403
        %v405 = vpop.f32.mrb[0].mxu0
        %v406 = vadd.f32 %v307, %v405
        %v407 = vpop.f32.mrb[0].mxu0
        %v408 = vadd.f32 %v303, %v407
        %v409 = vpop.f32.mrb[0].mxu0
        %v410 = vadd.f32 %v307, %v409
        %411 = vdwg.mxu0
        %412 = vmatprep.subr.bf16.mxu0 %v352
        %413 = vmatpush1.bf16.msra.mxu0 %v351
        %414 = vmatprep.subr.bf16.mxu0 %v356
        %415 = vmatpush1.bf16.msra.mxu0 %v355
        %416 = vmatprep.subr.bf16.mxu0 0
        %417 = vmatpush1.bf16.msra.mxu0 0
        %418 = vmatprep.subr.bf16.mxu0 0
        %419 = vmatpush1.bf16.msra.mxu0 0
        %420 = vmatprep.subr.bf16.mxu0 0
        %421 = vmatpush1.bf16.msra.mxu0 0
        %422 = vmatprep.subr.bf16.mxu0 0
        %423 = vmatpush1.bf16.msra.mxu0 0
        %424 = vmatprep.subr.bf16.mxu0 0
        %425 = vmatpush1.bf16.msra.mxu0 0
        %426 = vmatprep.subr.bf16.mxu0 0
        %427 = vmatpush1.bf16.msra.mxu0 0
        %428 = vmatprep.subr.bf16.mxu0 0
        %429 = vmatpush1.bf16.msra.mxu0 0
        %430 = vmatprep.subr.bf16.mxu0 0
        %431 = vmatpush1.bf16.msra.mxu0 0
        %432 = vmatprep.subr.bf16.mxu0 0
        %433 = vmatpush1.bf16.msra.mxu0 0
        %434 = vmatprep.subr.bf16.mxu0 0
        %435 = vmatpush1.bf16.msra.mxu0 0
        %436 = vmatprep.subr.bf16.mxu0 0
        %437 = vmatpush1.bf16.msra.mxu0 0
        %438 = vmatprep.subr.bf16.mxu0 0
        %439 = vmatpush1.bf16.msra.mxu0 0
        %440 = vmatprep.subr.bf16.mxu0 0
        %441 = vmatpush1.bf16.msra.mxu0 0
        %442 = vmatprep.subr.bf16.mxu0 0
        %443 = vmatpush1.bf16.msra.mxu0 0
        %444 = vmatprep.mubr.bf16.mxu0 0
        %445 = vmatmul.mubr.bf16.gmra.mrb[0].mxu0 %v367
        %v446 = vpop.f32.mrb[0].mxu0
        %v447 = vadd.f32 %v311, %v446
        %v448 = vpop.f32.mrb[0].mxu0
        %v449 = vadd.f32 %v315, %v448
        %v450 = vpop.f32.mrb[0].mxu0
        %v451 = vadd.f32 %v311, %v450
        %v452 = vpop.f32.mrb[0].mxu0
        %v453 = vadd.f32 %v315, %v452
        %454 = vdwg.mxu0
        // Predicated region
        $region49: #{tpu_custom_call.1} parent=31 // pred_check
          %p455 = pneg %p277
        $region50: #{tpu_custom_call.1} parent=31 // pred_check_branch
          %457 = sbr.rel (%p455) target = $region52
        $region51: #{tpu_custom_call.1} parent=31 // pred_region
          %v458 = vld [vmem:[#allocation2] sm:$0xff]
          %v459 = vld [vmem:[#allocation2 + $0x8] sm:$0xff]
          %v460 = vmax.f32 %v404, %v447
          %v461 = vmax.f32 %v406, %v449
          %v462 = vmax.f32 %v460, %v461
          %463 = vmax.xlane.f32.xlu0 %v462
          %v464 = vpop.xlane.xlu0 %463
          %v465 = vmax.f32 %v408, %v451
          %v466 = vmax.f32 %v410, %v453
          %v467 = vmax.f32 %v465, %v466
          %468 = vmax.xlane.f32.xlu0 %v467
          %v469 = vpop.xlane.xlu0 %468
          %v470 = vmax.f32 %v458, %v464
          %v471 = vmax.f32 %v459, %v469
          %v472 = vld [vmem:[#allocation3] sm:$0xff]
          %v473 = vld [vmem:[#allocation3 + $0x8] sm:$0xff]
          %v474 = vsub.f32 %v458, %v470
          %v475 = vsub.f32 %v459, %v471
          %v476 = vmul.f32 %v474, 1.442695
          %v477 = vpow.pop %v476
          %v478 = vmul.f32 %v475, 1.442695
          %v479 = vpow.pop %v478
          %v480 = vmul.f32 %v472, %v477
          %v481 = vmul.f32 %v473, %v479
          %483 = vset.pattern.permute.xlu0 0
          %484 = vperm.xlu0 %483, %v470
          %v485 = vpop.permute.xlu0 %484
          %488 = vset.pattern.permute.xlu0 0
          %489 = vperm.xlu0 %488, %v471
          %v490 = vpop.permute.xlu0 %489
          %v492 = vsub.f32 %v404, %v485
          %v493 = vsub.f32 %v406, %v485
          %v494 = vsub.f32 %v447, %v485
          %v495 = vsub.f32 %v449, %v485
          %v496 = vsub.f32 %v408, %v490
          %v497 = vsub.f32 %v410, %v490
          %v498 = vsub.f32 %v451, %v490
          %v499 = vsub.f32 %v453, %v490
          %v500 = vmul.f32 %v492, 1.442695
          %v501 = vpow.pop %v500
          %v502 = vmul.f32 %v493, 1.442695
          %v503 = vpow.pop %v502
          %v504 = vmul.f32 %v494, 1.442695
          %v505 = vpow.pop %v504
          %v506 = vmul.f32 %v495, 1.442695
          %v507 = vpow.pop %v506
          %v508 = vmul.f32 %v496, 1.442695
          %v509 = vpow.pop %v508
          %v510 = vmul.f32 %v497, 1.442695
          %v511 = vpow.pop %v510
          %v512 = vmul.f32 %v498, 1.442695
          %v513 = vpow.pop %v512
          %v514 = vmul.f32 %v499, 1.442695
          %v515 = vpow.pop %v514
          %v516 = vadd.f32 %v501, %v503
          %v517 = vadd.f32 %v516, %v505
          %v518 = vadd.f32 %v517, %v507
          %519 = vadd.xlane.f32.xlu0 %v518
          %v520 = vpop.xlane.xlu0 %519
          %v521 = vadd.f32 %v509, %v511
          %v522 = vadd.f32 %v521, %v513
          %v523 = vadd.f32 %v522, %v515
          %524 = vadd.xlane.f32.xlu0 %v523
          %v525 = vpop.xlane.xlu0 %524
          %v526 = vadd.f32 %v480, %v520
          %v527 = vadd.f32 %v481, %v525
          %vm528 = vcmask 7168
          %529 = vst.msk [vmem:[#allocation3] sm:$0xff] %vm528, %v526
          %530 = vst.msk [vmem:[#allocation3 + $0x8] sm:$0xff] %vm528, %v527
          %531 = vst.msk [vmem:[#allocation2] sm:$0xff] %vm528, %v470
          %532 = vst.msk [vmem:[#allocation2 + $0x8] sm:$0xff] %vm528, %v471
        $region52: #{tpu_custom_call.1} parent=31 // pred_fallthru
          _
        %p533 = scmp.eq.s32.totalorder %s27, 1
        %p534 = pnand %p533, %p278
        %p535 = pneg %p534
        // Predicated region
        $region53: #{tpu_custom_call.1} parent=31 // pred_check
          _
        $region54: #{tpu_custom_call.1} parent=31 // pred_check_branch
          %537 = sbr.rel (%p534) target = $region56
        $region55: #{tpu_custom_call.1} parent=31 // pred_region
          %v538 = vld [vmem:[#allocation2] sm:$0xff]
          %v539 = vld [vmem:[#allocation2 + $0x8] sm:$0xff]
          %v540 = vld [vmem:[#allocation3] sm:$0xff]
          %v541 = vld [vmem:[#allocation3 + $0x8] sm:$0xff]
          %v542 = vlog2.pop %v540
          %v543 = vmul.f32 %v542, 0.6931472
          %v544 = vlog2.pop %v541
          %v545 = vmul.f32 %v544, 0.6931472
          %v546 = vadd.f32 %v538, %v543
          %v547 = vadd.f32 %v539, %v545
          %vm548 = vcmask 7168
          %549 = vst.msk [vmem:[#allocation2] sm:$0xff] %vm548, %v546
          %550 = vst.msk [vmem:[#allocation2 + $0x8] sm:$0xff] %vm548, %v547
        $region56: #{tpu_custom_call.1} parent=31 // pred_fallthru
          _
        // Predicated region
        $region57: #{tpu_custom_call.1} parent=31 // pred_check
          %p551 = pneg %p533
        $region58: #{tpu_custom_call.1} parent=31 // pred_check_branch
          %553 = sbr.rel (%p551) target = $region60
        $region59: #{tpu_custom_call.1} parent=31 // pred_region
          %v554 = vld [vmem:[#allocation2] sm:$0xff]
          %v555 = vld [vmem:[#allocation2 + $0x8] sm:$0xff]
          %557 = vset.pattern.permute.xlu0 0
          %558 = vperm.xlu0 %557, %v554
          %v559 = vpop.permute.xlu0 %558
          %562 = vset.pattern.permute.xlu0 0
          %563 = vperm.xlu0 %562, %v555
          %v564 = vpop.permute.xlu0 %563
          %v566 = vsub.f32 %v404, %v559
          %v567 = vsub.f32 %v406, %v559
          %v568 = vsub.f32 %v447, %v559
          %v569 = vsub.f32 %v449, %v559
          %v570 = vsub.f32 %v408, %v564
          %v571 = vsub.f32 %v410, %v564
          %v572 = vsub.f32 %v451, %v564
          %v573 = vsub.f32 %v453, %v564
          %574 = vst [vmem:[%s269] sm:$0xff] %v566
          %575 = vst [vmem:[%s269 + $0x8] sm:$0xff] %v567
          %576 = vst [vmem:[%s269 + $0x10] sm:$0xff] %v568
          %577 = vst [vmem:[%s269 + $0x18] sm:$0xff] %v569
          %578 = vst [vmem:[%s269 + $0x20] sm:$0xff] %v570
          %579 = vst [vmem:[%s269 + $0x28] sm:$0xff] %v571
          %580 = vst [vmem:[%s269 + $0x30] sm:$0xff] %v572
          %581 = vst [vmem:[%s269 + $0x38] sm:$0xff] %v573
        $region60: #{tpu_custom_call.1} parent=31 // pred_fallthru
          _
        %s582 = sand.u32 %s130, 1
        %s583 = scalar_lea.sflag [#allocation6], %s582
        %s584 = sand.u32 %s130, 1
        %s585 = smul.addr %s584, 64
        %s586 = scalar_lea.vmem [#allocation10], %s585
        // Predicated region
        $region61: #{tpu_custom_call.1} parent=31 // pred_check
          %p587 = pneg %p140
        $region62: #{tpu_custom_call.1} parent=31 // pred_check_branch
          %589 = sbr.rel (%p587) target = $region64
        $region63: #{tpu_custom_call.1} parent=31 // pred_region
          %s590 = smul.u32 %s27, %s28
          %s591 = smul.u32 2, %s26
          %s592 = smul.u32 4, %s590
          %s594 = ssub.s32 1024, 1024
          %595 = vsyncadd %s583, %s594
          %s596 = smul.addr %s591, 8
          %s597 = sadd.s32 %s592, %s596
          %s598 = smul.addr %s597, 128
          %s599 = scalar_lea.hbm %s3, %s598
          %s600 = sshll.u32 %s586, 4
          %s601 = int_to_ptr.vmem [resolvable:$true] %s600
          %606 = dma.vmem_to_hbm [thread:$0]  %s601, 1024, %s599, %s583, 512, 1024, 32
        $region64: #{tpu_custom_call.1} parent=31 // pred_fallthru
          _
      $region32: #{tpu_custom_call.1} parent=5 // pred_fallthru
        _
      %p607 = scmp.le.s32.totalorder 2, %s16
      // Predicated region
      $region65: #{tpu_custom_call.1} parent=5 // pred_check
        %p608 = pneg %p607
      $region66: #{tpu_custom_call.1} parent=5 // pred_check_branch
        %610 = sbr.rel (%p608) target = $region68
      $region67: #{tpu_custom_call.1} parent=5 // pred_region
        %s611 = ssub.s32 %s16, 2
        // Predicated region
        $region69: #{tpu_custom_call.1} parent=67 // pred_check
          %p612 = pneg %p146
        $region70: #{tpu_custom_call.1} parent=67 // pred_check_branch
          %614 = sbr.rel (%p612) target = $region72
        $region71: #{tpu_custom_call.1} parent=67 // pred_region
          %s615 = sand.u32 %s131, 1
          %s616 = scalar_lea.sflag [#allocation6], %s615
          %s617 = sand.u32 %s131, 1
          %s618 = smul.addr %s617, 64
          %s619 = scalar_lea.vmem [#allocation10], %s618
          %620 = dma.done %s616, 1024
        $region72: #{tpu_custom_call.1} parent=67 // pred_fallthru
          _
      $region68: #{tpu_custom_call.1} parent=5 // pred_fallthru
        _
    $region6: #{tpu_custom_call.1} parent=1 // loop_footer
      %s20 = sadd.s32 1, %s16
    $region7: #{tpu_custom_call.1} parent=1 // loop_footer_branch
      %15 = sbr.rel target = $region3
    $region8: #{tpu_custom_call.1} parent=1 // loop_exit
      _
    %621 = vsyncpa [#allocation5], 1
    %s622 = scalar_lea.sflag [#allocation5], 1
    %623 = vsyncpa %s622, 1
    %624 = vsyncpa [#allocation8], 1
    %s625 = scalar_lea.sflag [#allocation8], 1
    %626 = vsyncpa %s625, 1
    %627 = vsyncpa [#allocation6], 1
    %s628 = scalar_lea.sflag [#allocation6], 1
    %629 = vsyncpa %s628, 1

</llo_original>
